<compile_context>
chip_gen: v6e
topology: v6e:2x2x1
jax: 0.10.0
libtpu: 0.0.40
codegen_flags: <defaults>
</compile_context>

<pallas_src>
import math

import jax
import jax.numpy as jnp
from jax import lax
from jax.experimental import pallas as pl
from jax.experimental.pallas import tpu as pltpu

N_NODES = 64
C_IN = 32
C_OUT = 32           # == C_IN  ->  self.res = nn.Identity()
N_EDGES = 256
K_HOPS = 2
BN_EPS = 1e-5
LEAKY_SLOPE = 0.01   # nn.LeakyReLU() default

# dot_general dimension numbers for A @ B.T (contract the shared trailing axis).
_NT_DIMS = (((1,), (1,)), ((), ()))


def residual_layer_kernel(x_ref, ei_ref, ew_ref, p_ref, out_ref, stats_ref):
    """Whole forward fused in one kernel invocation (full-array blocks resident in VMEM).

    Inputs:
      x_ref  : (N, C)    node features, f32
      ei_ref : (2, E)    edge_index (row 0 = src, row 1 = dst), int32
      ew_ref : (1, E)    edge_weight, f32
      p_ref  : (3C+3, C) parameter slab: rows [0:3C] = stacked hop weights [W0;W1;W2],
               row 3C = gamma, row 3C+1 = beta, row 3C+2 = conv bias
    Outputs:
      out_ref   : (N, C)  layer output
      stats_ref : (2, 4)  row 0 = mean, row 1 = unbiased (ddof=1) variance of the
                  per-node L2 norms at stages [N, A, C, O]
    """
    n, c = x_ref.shape
    e = ew_ref.shape[1]
    kc = (K_HOPS + 1) * c

    x = x_ref[...]                                              # (N, C) f32
    w = p_ref[0:kc, :]                                          # (3C, C)
    gamma = p_ref[kc:kc + 1, :]                                 # (1, C)
    beta = p_ref[kc + 1:kc + 2, :]                              # (1, C)
    bias = p_ref[kc + 2:kc + 3, :]                              # (1, C)

    # ---- BatchNorm1d over nodes (training-mode batch stats), folded to one affine ----
    mean = jnp.mean(x, axis=0, keepdims=True)                   # (1, C)
    var = jnp.mean((x - mean) ** 2, axis=0, keepdims=True)      # biased var (BN forward)
    scale = gamma * lax.rsqrt(var + BN_EPS)                     # rsqrt -> EUP slot
    shift = beta - mean * scale
    h = x * scale + shift
    ss_n = jnp.sum(h * h, axis=1, keepdims=True)                # stage 'N' sum of squares

    # ---- LeakyReLU (negative_slope = 0.01) ----
    h = jnp.where(h >= 0, h, LEAKY_SLOPE * h)
    ss_a = jnp.sum(h * h, axis=1, keepdims=True)                # stage 'A'

    # ---- Dropout p=0.0 -> identity ----

    # ---- Densify the graph on the MXU (replaces the XLA scatter-add) ----
    # A[dst, src] = sum_e w_e : weighted dst one-hot (N,E) contracted against the
    # src one-hot (N,E) over the edge axis (A @ B.T form, MXU-native).
    node_ids = lax.broadcasted_iota(jnp.int32, (n, e), 0)       # (N, E) node index
    src = ei_ref[0:1, :]                                        # (1, E) int32
    dst = ei_ref[1:2, :]                                        # (1, E) int32
    w_e = ew_ref[...]                                           # (1, E) f32
    src_oh = jnp.where(node_ids == src, 1.0, 0.0)               # (N, E) f32
    dst_w = jnp.where(node_ids == dst, w_e, 0.0)                # (N, E) f32
    adj = lax.dot_general(dst_w, src_oh, _NT_DIMS,
                          preferred_element_type=jnp.float32)   # (N, N)

    # ---- TAGConv, K=2, normalize=False:  out = [h | A h | A^2 h] @ [W0; W1; W2] + b ----
    # f32 operands straight to the MXU (bf16 casts removed — pure overhead here).
    h1 = jnp.dot(adj, h, preferred_element_type=jnp.float32)    # 1-hop
    h2 = jnp.dot(adj, h1, preferred_element_type=jnp.float32)   # 2-hop
    hcat = jnp.concatenate([h, h1, h2], axis=1)                 # (N, 3C)
    out = jnp.dot(hcat, w, preferred_element_type=jnp.float32) + bias
    ss_c = jnp.sum(out * out, axis=1, keepdims=True)            # stage 'C'

    # ---- mlp = Identity; residual skip (Identity since C_in == C_out) ----
    out = out + x
    ss_o = jnp.sum(out * out, axis=1, keepdims=True)            # stage 'O'
    out_ref[...] = out

    # ---- fused per-stage statistics (single sqrt, single mean/var pass) ----
    nrm = jnp.sqrt(jnp.concatenate([ss_n, ss_a, ss_c, ss_o], axis=1))   # (N, 4)
    nrm_mean = jnp.mean(nrm, axis=0, keepdims=True)                     # (1, 4)
    nrm_var = jnp.sum((nrm - nrm_mean) ** 2, axis=0, keepdims=True) / (n - 1.0)
    stats_ref[...] = jnp.concatenate([nrm_mean, nrm_var], axis=0)       # (2, 4)


@jax.jit
def _residual_layer_forward_jit(x, edge_index, edge_weight, w, b, gamma, beta):
    """Pack parameters into one slab and run the fused kernel — all in one XLA program."""
    n, c_in = x.shape
    c_out = w.shape[-1]
    # Stack the K+1 hop weights so the kernel does a single (N, 3C) @ (3C, C) matmul,
    # and fold gamma / beta / bias into the same slab -> one input DMA instead of four.
    w_stacked = w.reshape((K_HOPS + 1) * c_in, c_out)
    params = jnp.concatenate([w_stacked, gamma, beta, b], axis=0)   # (3C+3, C)
    ew = edge_weight.reshape(1, -1)                                 # (1, E)

    vmem = pl.BlockSpec(memory_space=pltpu.MemorySpace.VMEM)
    return pl.pallas_call(
        residual_layer_kernel,
        out_shape=(
            jax.ShapeDtypeStruct((n, c_out), jnp.float32),   # h
            jax.ShapeDtypeStruct((2, 4), jnp.float32),       # [means; vars] for N/A/C/O
        ),
        in_specs=[vmem] * 4,
        out_specs=(vmem, vmem),
    )(x, edge_index, ew, params)


def residual_layer_forward(x, edge_index, edge_weight, params):
    """Wrapper: run the fused forward, fetch the 8 norm scalars in ONE host transfer."""
    h, stats = _residual_layer_forward_jit(
        x, edge_index, edge_weight,
        params["w"], params["b"], params["gamma"], params["beta"])
    stats_host = jax.device_get(stats)   # single device->host sync for all 8 statistics
    norms = []
    for i, tag in enumerate(("N", "A", "C", "O")):
        norms += [{"layer": tag, "norm": float(stats_host[0, i])},
                  {"layer": f"{tag}-var", "norm": float(stats_host[1, i])}]
    return h, norms


def reference_forward(x, edge_index, edge_weight, params):
    """Pure-JAX reference mirroring the PyTorch module (f32, highest matmul precision)."""
    n = x.shape[0]
    hi = lax.Precision.HIGHEST
    adj = jnp.zeros((n, n), jnp.float32).at[edge_index[1], edge_index[0]].add(edge_weight)
    mean = x.mean(0, keepdims=True)
    var = ((x - mean) ** 2).mean(0, keepdims=True)
    h = (x - mean) / jnp.sqrt(var + BN_EPS) * params["gamma"] + params["beta"]
    h = jnp.where(h >= 0, h, LEAKY_SLOPE * h)
    h1 = jnp.dot(adj, h, precision=hi)
    h2 = jnp.dot(adj, h1, precision=hi)
    out = (jnp.dot(h, params["w"][0], precision=hi)
           + jnp.dot(h1, params["w"][1], precision=hi)
           + jnp.dot(h2, params["w"][2], precision=hi)
           + params["b"])
    return out + x


if __name__ == "__main__":
    key = jax.random.PRNGKey(0)
    kw, kb, kx, ke, kew = jax.random.split(key, 5)

    params = {
        "w": jax.random.normal(kw, (K_HOPS + 1, C_IN, C_OUT), jnp.float32) * 0.1,
        "b": jax.random.normal(kb, (1, C_OUT), jnp.float32) * 0.01,
        "gamma": jnp.ones((1, C_IN), jnp.float32),   # BatchNorm default init
        "beta": jnp.zeros((1, C_IN), jnp.float32),
    }

    x = jax.random.normal(kx, (N_NODES, C_IN), jnp.float32)
    edge_index = jax.random.randint(ke, (2, N_EDGES), 0, N_NODES, dtype=jnp.int32)
    edge_weight = jax.random.uniform(kew, (N_EDGES,), jnp.float32)

    h, norms = residual_layer_forward(x, edge_index, edge_weight, params)
    h = jax.block_until_ready(h)

    h_ref = reference_forward(x, edge_index, edge_weight, params)
    assert jnp.allclose(h, h_ref, atol=2e-3, rtol=2e-3), "kernel/reference mismatch"
    assert len(norms) == 8 and all(math.isfinite(d["norm"]) for d in norms)

    print("KERNEL_OK")
</pallas_src>

<mosaic_0001>
module attributes {stable_mosaic.version = 11 : i64} {
  func.func @residual_layer_kernel(%arg0: memref<64x32xf32, #tpu.memory_space<vmem>>, %arg1: memref<2x256xi32, #tpu.memory_space<vmem>>, %arg2: memref<1x256xf32, #tpu.memory_space<vmem>>, %arg3: memref<99x32xf32, #tpu.memory_space<vmem>>, %arg4: memref<64x32xf32, #tpu.memory_space<vmem>>, %arg5: memref<2x4xf32, #tpu.memory_space<vmem>>) attributes {dimension_semantics = [], scalar_prefetch = 0 : i64, scratch_operands = 0 : i64, tpu.core_type = #tpu.core_type<tc>} {
    %c0 = arith.constant 0 : index
    %c0_0 = arith.constant 0 : index
    %0 = vector.load %arg0[%c0, %c0_0] : memref<64x32xf32, #tpu.memory_space<vmem>>, vector<64x32xf32>
    %c0_1 = arith.constant 0 : index
    %c0_2 = arith.constant 0 : index
    %1 = vector.load %arg3[%c0_1, %c0_2] : memref<99x32xf32, #tpu.memory_space<vmem>>, vector<96x32xf32>
    %c96 = arith.constant 96 : index
    %c0_3 = arith.constant 0 : index
    %2 = vector.load %arg3[%c96, %c0_3] : memref<99x32xf32, #tpu.memory_space<vmem>>, vector<1x32xf32>
    %c97 = arith.constant 97 : index
    %c0_4 = arith.constant 0 : index
    %3 = vector.load %arg3[%c97, %c0_4] : memref<99x32xf32, #tpu.memory_space<vmem>>, vector<1x32xf32>
    %c98 = arith.constant 98 : index
    %c0_5 = arith.constant 0 : index
    %4 = vector.load %arg3[%c98, %c0_5] : memref<99x32xf32, #tpu.memory_space<vmem>>, vector<1x32xf32>
    %cst = arith.constant dense<0.000000e+00> : vector<32xf32>
    %5 = vector.multi_reduction <add>, %0, %cst [0] : vector<64x32xf32> to vector<32xf32>
    %6 = vector.shape_cast %5 : vector<32xf32> to vector<1x32xf32>
    %cst_6 = arith.constant 6.400000e+01 : f32
    %7 = vector.broadcast %cst_6 : f32 to vector<1x32xf32>
    %8 = arith.divf %6, %7 : vector<1x32xf32>
    %9 = vector.broadcast %8 : vector<1x32xf32> to vector<64x32xf32>
    %10 = arith.subf %0, %9 : vector<64x32xf32>
    %11 = arith.mulf %10, %10 : vector<64x32xf32>
    %cst_7 = arith.constant dense<0.000000e+00> : vector<32xf32>
    %12 = vector.multi_reduction <add>, %11, %cst_7 [0] : vector<64x32xf32> to vector<32xf32>
    %13 = vector.shape_cast %12 : vector<32xf32> to vector<1x32xf32>
    %cst_8 = arith.constant 6.400000e+01 : f32
    %14 = vector.broadcast %cst_8 : f32 to vector<1x32xf32>
    %15 = arith.divf %13, %14 : vector<1x32xf32>
    %cst_9 = arith.constant 9.99999974E-6 : f32
    %16 = vector.broadcast %cst_9 : f32 to vector<1x32xf32>
    %17 = arith.addf %15, %16 : vector<1x32xf32>
    %18 = math.rsqrt %17 : vector<1x32xf32>
    %19 = arith.mulf %2, %18 : vector<1x32xf32>
    %20 = arith.mulf %8, %19 : vector<1x32xf32>
    %21 = arith.subf %3, %20 : vector<1x32xf32>
    %22 = vector.broadcast %19 : vector<1x32xf32> to vector<64x32xf32>
    %23 = arith.mulf %0, %22 : vector<64x32xf32>
    %24 = vector.broadcast %21 : vector<1x32xf32> to vector<64x32xf32>
    %25 = arith.addf %23, %24 : vector<64x32xf32>
    %26 = arith.mulf %25, %25 : vector<64x32xf32>
    %cst_10 = arith.constant dense<0.000000e+00> : vector<64xf32>
    %27 = vector.multi_reduction <add>, %26, %cst_10 [1] : vector<64x32xf32> to vector<64xf32>
    %28 = vector.shape_cast %27 : vector<64xf32> to vector<64x1xf32>
    %cst_11 = arith.constant 0.000000e+00 : f32
    %29 = vector.broadcast %cst_11 : f32 to vector<64x32xf32>
    %30 = arith.cmpf oge, %25, %29 : vector<64x32xf32>
    %cst_12 = arith.constant 0.00999999977 : f32
    %31 = vector.broadcast %cst_12 : f32 to vector<64x32xf32>
    %32 = arith.mulf %31, %25 : vector<64x32xf32>
    %33 = arith.select %30, %25, %32 : vector<64x32xi1>, vector<64x32xf32>
    %34 = arith.mulf %33, %33 : vector<64x32xf32>
    %cst_13 = arith.constant dense<0.000000e+00> : vector<64xf32>
    %35 = vector.multi_reduction <add>, %34, %cst_13 [1] : vector<64x32xf32> to vector<64xf32>
    %36 = vector.shape_cast %35 : vector<64xf32> to vector<64x1xf32>
    %37 = tpu.iota {dimensions = array<i32: 0>} : vector<64x256xi32>
    %c0_14 = arith.constant 0 : index
    %c0_15 = arith.constant 0 : index
    %38 = vector.load %arg1[%c0_14, %c0_15] : memref<2x256xi32, #tpu.memory_space<vmem>>, vector<1x256xi32>
    %c1 = arith.constant 1 : index
    %c0_16 = arith.constant 0 : index
    %39 = vector.load %arg1[%c1, %c0_16] : memref<2x256xi32, #tpu.memory_space<vmem>>, vector<1x256xi32>
    %c0_17 = arith.constant 0 : index
    %c0_18 = arith.constant 0 : index
    %40 = vector.load %arg2[%c0_17, %c0_18] : memref<1x256xf32, #tpu.memory_space<vmem>>, vector<1x256xf32>
    %41 = vector.broadcast %38 : vector<1x256xi32> to vector<64x256xi32>
    %42 = arith.cmpi eq, %37, %41 : vector<64x256xi32>
    %cst_19 = arith.constant 1.000000e+00 : f32
    %cst_20 = arith.constant 0.000000e+00 : f32
    %43 = vector.broadcast %cst_19 : f32 to vector<64x256xf32>
    %44 = vector.broadcast %cst_20 : f32 to vector<64x256xf32>
    %45 = arith.select %42, %43, %44 : vector<64x256xi1>, vector<64x256xf32>
    %46 = vector.broadcast %39 : vector<1x256xi32> to vector<64x256xi32>
    %47 = arith.cmpi eq, %37, %46 : vector<64x256xi32>
    %cst_21 = arith.constant 0.000000e+00 : f32
    %48 = vector.shape_cast %40 : vector<1x256xf32> to vector<1x256xf32>
    %49 = vector.broadcast %48 : vector<1x256xf32> to vector<64x256xf32>
    %50 = vector.broadcast %cst_21 : f32 to vector<64x256xf32>
    %51 = arith.select %47, %49, %50 : vector<64x256xi1>, vector<64x256xf32>
    %cst_22 = arith.constant dense<0.000000e+00> : vector<64x64xf32>
    %52 = tpu.matmul %51, %45, %cst_22 {dimension_numbers = #tpu.dot_dimension_numbers<[1], [1], [0], [0], [0, 0, 1, 0], [], []>} : vector<64x256xf32>, vector<64x256xf32>, vector<64x64xf32> -> vector<64x64xf32>
    %cst_23 = arith.constant dense<0.000000e+00> : vector<64x32xf32>
    %53 = tpu.matmul %52, %33, %cst_23 {dimension_numbers = #tpu.dot_dimension_numbers<[1], [0], [0], [1], [0, 0, 1, 1], [], []>} : vector<64x64xf32>, vector<64x32xf32>, vector<64x32xf32> -> vector<64x32xf32>
    %cst_24 = arith.constant dense<0.000000e+00> : vector<64x32xf32>
    %54 = tpu.matmul %52, %53, %cst_24 {dimension_numbers = #tpu.dot_dimension_numbers<[1], [0], [0], [1], [0, 0, 1, 1], [], []>} : vector<64x64xf32>, vector<64x32xf32>, vector<64x32xf32> -> vector<64x32xf32>
    %55 = tpu.concatenate %33, %53, %54 in 1 : vector<64x32xf32>, vector<64x32xf32>, vector<64x32xf32> -> vector<64x96xf32>
    %cst_25 = arith.constant dense<0.000000e+00> : vector<64x32xf32>
    %56 = tpu.matmul %55, %1, %cst_25 {dimension_numbers = #tpu.dot_dimension_numbers<[1], [0], [0], [1], [0, 0, 1, 1], [], []>} : vector<64x96xf32>, vector<96x32xf32>, vector<64x32xf32> -> vector<64x32xf32>
    %57 = vector.broadcast %4 : vector<1x32xf32> to vector<64x32xf32>
    %58 = arith.addf %56, %57 : vector<64x32xf32>
    %59 = arith.mulf %58, %58 : vector<64x32xf32>
    %cst_26 = arith.constant dense<0.000000e+00> : vector<64xf32>
    %60 = vector.multi_reduction <add>, %59, %cst_26 [1] : vector<64x32xf32> to vector<64xf32>
    %61 = vector.shape_cast %60 : vector<64xf32> to vector<64x1xf32>
    %62 = arith.addf %58, %0 : vector<64x32xf32>
    %63 = arith.mulf %62, %62 : vector<64x32xf32>
    %cst_27 = arith.constant dense<0.000000e+00> : vector<64xf32>
    %64 = vector.multi_reduction <add>, %63, %cst_27 [1] : vector<64x32xf32> to vector<64xf32>
    %65 = vector.shape_cast %64 : vector<64xf32> to vector<64x1xf32>
    %c0_28 = arith.constant 0 : index
    %c0_29 = arith.constant 0 : index
    %66 = vector.load %arg4[%c0_28, %c0_29] : memref<64x32xf32, #tpu.memory_space<vmem>>, vector<64x32xf32>
    tpu.vector_store %arg4[%c0_28, %c0_29], %62 {strides = array<i32>} : memref<64x32xf32, #tpu.memory_space<vmem>>, vector<64x32xf32>,
    %67 = tpu.concatenate %28, %36, %61, %65 in 1 : vector<64x1xf32>, vector<64x1xf32>, vector<64x1xf32>, vector<64x1xf32> -> vector<64x4xf32>
    %68 = math.sqrt %67 : vector<64x4xf32>
    %cst_30 = arith.constant dense<0.000000e+00> : vector<4xf32>
    %69 = vector.multi_reduction <add>, %68, %cst_30 [0] : vector<64x4xf32> to vector<4xf32>
    %70 = vector.shape_cast %69 : vector<4xf32> to vector<1x4xf32>
    %cst_31 = arith.constant 6.400000e+01 : f32
    %71 = vector.broadcast %cst_31 : f32 to vector<1x4xf32>
    %72 = arith.divf %70, %71 : vector<1x4xf32>
    %73 = vector.broadcast %72 : vector<1x4xf32> to vector<64x4xf32>
    %74 = arith.subf %68, %73 : vector<64x4xf32>
    %75 = arith.mulf %74, %74 : vector<64x4xf32>
    %cst_32 = arith.constant dense<0.000000e+00> : vector<4xf32>
    %76 = vector.multi_reduction <add>, %75, %cst_32 [0] : vector<64x4xf32> to vector<4xf32>
    %77 = vector.shape_cast %76 : vector<4xf32> to vector<1x4xf32>
    %cst_33 = arith.constant 6.300000e+01 : f32
    %78 = vector.broadcast %cst_33 : f32 to vector<1x4xf32>
    %79 = arith.divf %77, %78 : vector<1x4xf32>
    %80 = tpu.concatenate %72, %79 in 0 : vector<1x4xf32>, vector<1x4xf32> -> vector<2x4xf32>
    %c0_34 = arith.constant 0 : index
    %c0_35 = arith.constant 0 : index
    %81 = vector.load %arg5[%c0_34, %c0_35] : memref<2x4xf32, #tpu.memory_space<vmem>>, vector<2x4xf32>
    tpu.vector_store %arg5[%c0_34, %c0_35], %80 {strides = array<i32>} : memref<2x4xf32, #tpu.memory_space<vmem>>, vector<2x4xf32>,
    return
  }
}

</mosaic_0001>

<llo_original>
// kernel: _residual_layer_forward_jit.1
$region0: #{_residual_layer_forward_jit.1}
  #allocation0 [shape = 'u32[]', space=smem, size = 0x4, offset = 0x4, fixed_abs, tag = 'smem constant byte address 0x4 - core index']
  #allocation1 [shape = 'u32[144,128]{1,0:T(1,128)}', space=vmem, size = 0x12000, scoped, tag = 'internal scratch']
  %s0 = inlined_call_operand.vmem [shape: f32[64,32], index: 0, kind: input, shape index: {}]
  %s1 = inlined_call_operand.vmem [shape: s32[2,256], index: 1, kind: input, shape index: {}]
  %s2 = inlined_call_operand.vmem [shape: f32[1,256], index: 2, kind: input, shape index: {}]
  %s3 = inlined_call_operand.vmem [shape: f32[99,32], index: 3, kind: input, shape index: {}]
  %s4 = inlined_call_operand.vmem [shape: f32[64,32], index: 4, kind: output, shape index: {0}]
  %s5 = inlined_call_operand.hbm [shape: f32[2,4], index: 5, kind: output, shape index: {1}]
  %6 = xla_tuple %s4, %s5
  %s7 = sld [smem:[#allocation0]]
  $region34: #{_residual_layer_forward_jit.1} parent=0
    _
  %s9 = ssub.s32 1, %s7
  %s10 = scalar_select 0, %s9, %s7
  $region1: #{_residual_layer_forward_jit.1} parent=0
    #allocation2 [shape = 'u8[1024]{0}', space=vmem, size = 0x400, scoped, tag = 'output window, operand 1, single buffered']
    #allocation3 [shape = 's32[1]{0}', space=sflag, size = 0x4, scoped, tag = 'scoped memory for _residual_layer_forward_jit.1']
    %11 = vsyncpa [#allocation3], 0
    // Predicated region
    $region2: #{_residual_layer_forward_jit.1} parent=1 // pred_check
      _
    $region3: #{_residual_layer_forward_jit.1} parent=1 // pred_check_branch
      %13 = sbr.rel (0) target = $region5
    $region4: #{_residual_layer_forward_jit.1} parent=1 // pred_region
      _
    $region5: #{_residual_layer_forward_jit.1} parent=1 // pred_fallthru
      _
    // Predicated region
    $region6: #{_residual_layer_forward_jit.1} parent=1 // pred_check
      _
    $region7: #{_residual_layer_forward_jit.1} parent=1 // pred_check_branch
      %15 = sbr.rel (0) target = $region9
    $region8: #{_residual_layer_forward_jit.1} parent=1 // pred_region
      _
    $region9: #{_residual_layer_forward_jit.1} parent=1 // pred_fallthru
      _
    // Predicated region
    $region10: #{_residual_layer_forward_jit.1} parent=1 // pred_check
      _
    $region11: #{_residual_layer_forward_jit.1} parent=1 // pred_check_branch
      %17 = sbr.rel (0) target = $region13
    $region12: #{_residual_layer_forward_jit.1} parent=1 // pred_region
      _
    $region13: #{_residual_layer_forward_jit.1} parent=1 // pred_fallthru
      _
    // Predicated region
    $region14: #{_residual_layer_forward_jit.1} parent=1 // pred_check
      _
    $region15: #{_residual_layer_forward_jit.1} parent=1 // pred_check_branch
      %19 = sbr.rel (0) target = $region17
    $region16: #{_residual_layer_forward_jit.1} parent=1 // pred_region
      _
    $region17: #{_residual_layer_forward_jit.1} parent=1 // pred_fallthru
      _
    %v20 = vld [vmem:[%s0] sm:$0xff]
    %v21 = vld [vmem:[%s0 + $0x8] sm:$0xff]
    %v22 = vld [vmem:[%s0 + $0x10] sm:$0xff]
    %v23 = vld [vmem:[%s0 + $0x18] sm:$0xff]
    %v24 = vld [vmem:[%s0 + $0x20] sm:$0xff]
    %v25 = vld [vmem:[%s0 + $0x28] sm:$0xff]
    %v26 = vld [vmem:[%s0 + $0x30] sm:$0xff]
    %v27 = vld [vmem:[%s0 + $0x38] sm:$0xff]
    %v28 = vld [vmem:[%s3] sm:$0xff]
    %v29 = vld [vmem:[%s3 + $0x8] sm:$0xff]
    %v30 = vld [vmem:[%s3 + $0x10] sm:$0xff]
    %v31 = vld [vmem:[%s3 + $0x18] sm:$0xff]
    %v32 = vld [vmem:[%s3 + $0x20] sm:$0xff]
    %v33 = vld [vmem:[%s3 + $0x28] sm:$0xff]
    %v34 = vld [vmem:[%s3 + $0x30] sm:$0xff]
    %v35 = vld [vmem:[%s3 + $0x38] sm:$0xff]
    %v36 = vld [vmem:[%s3 + $0x40] sm:$0xff]
    %v37 = vld [vmem:[%s3 + $0x48] sm:$0xff]
    %v38 = vld [vmem:[%s3 + $0x50] sm:$0xff]
    %v39 = vld [vmem:[%s3 + $0x58] sm:$0xff]
    %v40 = vld [vmem:[%s3 + $0x60] sm:$0x1]
    %v41 = vld [vmem:[%s3 + $0x61] sm:$0x1]
    %v42 = vld [vmem:[%s3 + $0x62] sm:$0x1]
    %vm43 = vcmask 261120
    %v44 = vsel %vm43, %v20, 0.0
    %v45 = vsel %vm43, %v21, 0.0
    %v46 = vadd.f32 %v44, %v45
    %v47 = vsel %vm43, %v22, 0.0
    %v48 = vadd.f32 %v46, %v47
    %v49 = vsel %vm43, %v23, 0.0
    %v50 = vadd.f32 %v48, %v49
    %v51 = vsel %vm43, %v24, 0.0
    %v52 = vadd.f32 %v50, %v51
    %v53 = vsel %vm43, %v25, 0.0
    %v54 = vadd.f32 %v52, %v53
    %v55 = vsel %vm43, %v26, 0.0
    %v56 = vadd.f32 %v54, %v55
    %v57 = vsel %vm43, %v27, 0.0
    %v58 = vadd.f32 %v56, %v57
    %v59 = vrot.slane %v58, 4
    %v60 = vadd.f32 %v58, %v59
    %v61 = vrot.slane %v60, 2
    %v62 = vadd.f32 %v60, %v61
    %v63 = vrot.slane %v62, 1
    %v64 = vadd.f32 %v62, %v63
    %v65 = vrcp.pop 64.0
    %v66 = vmul.f32 %v64, %v65
    %v67 = vsub.f32 %v20, %v66
    %v68 = vsub.f32 %v21, %v66
    %v69 = vsub.f32 %v22, %v66
    %v70 = vsub.f32 %v23, %v66
    %v71 = vsub.f32 %v24, %v66
    %v72 = vsub.f32 %v25, %v66
    %v73 = vsub.f32 %v26, %v66
    %v74 = vsub.f32 %v27, %v66
    %v75 = vmul.f32 %v67, %v67
    %v76 = vmul.f32 %v68, %v68
    %v77 = vmul.f32 %v69, %v69
    %v78 = vmul.f32 %v70, %v70
    %v79 = vmul.f32 %v71, %v71
    %v80 = vmul.f32 %v72, %v72
    %v81 = vmul.f32 %v73, %v73
    %v82 = vmul.f32 %v74, %v74
    %v83 = vsel %vm43, %v75, 0.0
    %v84 = vsel %vm43, %v76, 0.0
    %v85 = vadd.f32 %v83, %v84
    %v86 = vsel %vm43, %v77, 0.0
    %v87 = vadd.f32 %v85, %v86
    %v88 = vsel %vm43, %v78, 0.0
    %v89 = vadd.f32 %v87, %v88
    %v90 = vsel %vm43, %v79, 0.0
    %v91 = vadd.f32 %v89, %v90
    %v92 = vsel %vm43, %v80, 0.0
    %v93 = vadd.f32 %v91, %v92
    %v94 = vsel %vm43, %v81, 0.0
    %v95 = vadd.f32 %v93, %v94
    %v96 = vsel %vm43, %v82, 0.0
    %v97 = vadd.f32 %v95, %v96
    %v98 = vrot.slane %v97, 4
    %v99 = vadd.f32 %v97, %v98
    %v100 = vrot.slane %v99, 2
    %v101 = vadd.f32 %v99, %v100
    %v102 = vrot.slane %v101, 1
    %v103 = vadd.f32 %v101, %v102
    %v104 = vmul.f32 %v103, %v65
    %v105 = vadd.f32 %v104, 1e-05
    %v106 = vrsqrt.pop %v105
    %v107 = vmul.f32 %v40, %v106
    %v108 = vmul.f32 %v66, %v107
    %v109 = vsub.f32 %v41, %v108
    %v110 = vlaneseq
    %v111 = vshrl.u32 %v110, 7
    %v112 = vsub.s32 0, %v111
    %v113 = vrot.slane %v107, %v112
    %v114 = vmul.f32 %v20, %v113
    %v115 = vmul.f32 %v21, %v113
    %v116 = vmul.f32 %v22, %v113
    %v117 = vmul.f32 %v23, %v113
    %v118 = vmul.f32 %v24, %v113
    %v119 = vmul.f32 %v25, %v113
    %v120 = vmul.f32 %v26, %v113
    %v121 = vmul.f32 %v27, %v113
    %v122 = vlaneseq
    %v123 = vshrl.u32 %v122, 7
    %v124 = vsub.s32 0, %v123
    %v125 = vrot.slane %v109, %v124
    %v126 = vadd.f32 %v114, %v125
    %v127 = vadd.f32 %v115, %v125
    %v128 = vadd.f32 %v116, %v125
    %v129 = vadd.f32 %v117, %v125
    %v130 = vadd.f32 %v118, %v125
    %v131 = vadd.f32 %v119, %v125
    %v132 = vadd.f32 %v120, %v125
    %v133 = vadd.f32 %v121, %v125
    %v134 = vmul.f32 %v126, %v126
    %v135 = vmul.f32 %v127, %v127
    %v136 = vmul.f32 %v128, %v128
    %v137 = vmul.f32 %v129, %v129
    %v138 = vmul.f32 %v130, %v130
    %v139 = vmul.f32 %v131, %v131
    %v140 = vmul.f32 %v132, %v132
    %v141 = vmul.f32 %v133, %v133
    %v142 = vsel %vm43, %v134, 0.0
    %143 = vadd.xlane.f32.xlu0 %v142
    %v144 = vpop.xlane.xlu0 %143
    %v145 = vsel %vm43, %v135, 0.0
    %146 = vadd.xlane.f32.xlu0 %v145
    %v147 = vpop.xlane.xlu0 %146
    %v148 = vsel %vm43, %v136, 0.0
    %149 = vadd.xlane.f32.xlu0 %v148
    %v150 = vpop.xlane.xlu0 %149
    %v151 = vsel %vm43, %v137, 0.0
    %152 = vadd.xlane.f32.xlu0 %v151
    %v153 = vpop.xlane.xlu0 %152
    %v154 = vsel %vm43, %v138, 0.0
    %155 = vadd.xlane.f32.xlu0 %v154
    %v156 = vpop.xlane.xlu0 %155
    %v157 = vsel %vm43, %v139, 0.0
    %158 = vadd.xlane.f32.xlu0 %v157
    %v159 = vpop.xlane.xlu0 %158
    %v160 = vsel %vm43, %v140, 0.0
    %161 = vadd.xlane.f32.xlu0 %v160
    %v162 = vpop.xlane.xlu0 %161
    %v163 = vsel %vm43, %v141, 0.0
    %164 = vadd.xlane.f32.xlu0 %v163
    %v165 = vpop.xlane.xlu0 %164
    %vm166 = vcmp.ge.f32.partialorder %v126, 0.0
    %vm167 = vcmp.ge.f32.partialorder %v127, 0.0
    %vm168 = vcmp.ge.f32.partialorder %v128, 0.0
    %vm169 = vcmp.ge.f32.partialorder %v129, 0.0
    %vm170 = vcmp.ge.f32.partialorder %v130, 0.0
    %vm171 = vcmp.ge.f32.partialorder %v131, 0.0
    %vm172 = vcmp.ge.f32.partialorder %v132, 0.0
    %vm173 = vcmp.ge.f32.partialorder %v133, 0.0
    %v174 = vmul.f32 %v126, 0.01
    %v175 = vmul.f32 %v127, 0.01
    %v176 = vmul.f32 %v128, 0.01
    %v177 = vmul.f32 %v129, 0.01
    %v178 = vmul.f32 %v130, 0.01
    %v179 = vmul.f32 %v131, 0.01
    %v180 = vmul.f32 %v132, 0.01
    %v181 = vmul.f32 %v133, 0.01
    %v182 = vsel %vm166, %v126, %v174
    %v183 = vsel %vm167, %v127, %v175
    %v184 = vsel %vm168, %v128, %v176
    %v185 = vsel %vm169, %v129, %v177
    %v186 = vsel %vm170, %v130, %v178
    %v187 = vsel %vm171, %v131, %v179
    %v188 = vsel %vm172, %v132, %v180
    %v189 = vsel %vm173, %v133, %v181
    %v190 = vmul.f32 %v182, %v182
    %v191 = vmul.f32 %v183, %v183
    %v192 = vmul.f32 %v184, %v184
    %v193 = vmul.f32 %v185, %v185
    %v194 = vmul.f32 %v186, %v186
    %v195 = vmul.f32 %v187, %v187
    %v196 = vmul.f32 %v188, %v188
    %v197 = vmul.f32 %v189, %v189
    %v198 = vsel %vm43, %v190, 0.0
    %199 = vadd.xlane.f32.xlu0 %v198
    %v200 = vpop.xlane.xlu0 %199
    %v201 = vsel %vm43, %v191, 0.0
    %202 = vadd.xlane.f32.xlu0 %v201
    %v203 = vpop.xlane.xlu0 %202
    %v204 = vsel %vm43, %v192, 0.0
    %205 = vadd.xlane.f32.xlu0 %v204
    %v206 = vpop.xlane.xlu0 %205
    %v207 = vsel %vm43, %v193, 0.0
    %208 = vadd.xlane.f32.xlu0 %v207
    %v209 = vpop.xlane.xlu0 %208
    %v210 = vsel %vm43, %v194, 0.0
    %211 = vadd.xlane.f32.xlu0 %v210
    %v212 = vpop.xlane.xlu0 %211
    %v213 = vsel %vm43, %v195, 0.0
    %214 = vadd.xlane.f32.xlu0 %v213
    %v215 = vpop.xlane.xlu0 %214
    %v216 = vsel %vm43, %v196, 0.0
    %217 = vadd.xlane.f32.xlu0 %v216
    %v218 = vpop.xlane.xlu0 %217
    %v219 = vsel %vm43, %v197, 0.0
    %220 = vadd.xlane.f32.xlu0 %v219
    %v221 = vpop.xlane.xlu0 %220
    %v222 = vlaneseq
    %v223 = vshrl.u32 %v222, 7
    %v224 = vadd.s32 %v223, 8
    %v225 = vadd.s32 %v223, 16
    %v226 = vadd.s32 %v223, 24
    %v227 = vadd.s32 %v223, 32
    %v228 = vadd.s32 %v223, 40
    %v229 = vadd.s32 %v223, 48
    %v230 = vadd.s32 %v223, 56
    %v231 = vld [vmem:[%s1] ss:$2 sm:$0x3]
    %s232 = scalar_lea.vmem %s1, 1
    %v233 = vld [vmem:[%s232] ss:$2 sm:$0x3]
    %v234 = vld [vmem:[%s2] sm:$0x3]
    %v235 = vlaneseq
    %v236 = vshrl.u32 %v235, 7
    %v237 = vsub.s32 0, %v236
    %v238 = vrot.slane %v231, %v237
    %v239 = vlaneseq
    %v240 = vshrl.u32 %v239, 7
    %v241 = vsub.s32 1, %v240
    %v242 = vrot.slane %v231, %v241
    %vm243 = vcmp.eq.s32.totalorder %v223, %v238
    %vm244 = vcmp.eq.s32.totalorder %v223, %v242
    %vm245 = vcmp.eq.s32.totalorder %v224, %v238
    %vm246 = vcmp.eq.s32.totalorder %v224, %v242
    %vm247 = vcmp.eq.s32.totalorder %v225, %v238
    %vm248 = vcmp.eq.s32.totalorder %v225, %v242
    %vm249 = vcmp.eq.s32.totalorder %v226, %v238
    %vm250 = vcmp.eq.s32.totalorder %v226, %v242
    %vm251 = vcmp.eq.s32.totalorder %v227, %v238
    %vm252 = vcmp.eq.s32.totalorder %v227, %v242
    %vm253 = vcmp.eq.s32.totalorder %v228, %v238
    %vm254 = vcmp.eq.s32.totalorder %v228, %v242
    %vm255 = vcmp.eq.s32.totalorder %v229, %v238
    %vm256 = vcmp.eq.s32.totalorder %v229, %v242
    %vm257 = vcmp.eq.s32.totalorder %v230, %v238
    %vm258 = vcmp.eq.s32.totalorder %v230, %v242
    %v259 = vsel %vm243, 1.0, 0.0
    %v260 = vsel %vm244, 1.0, 0.0
    %v261 = vsel %vm245, 1.0, 0.0
    %v262 = vsel %vm246, 1.0, 0.0
    %v263 = vsel %vm247, 1.0, 0.0
    %v264 = vsel %vm248, 1.0, 0.0
    %v265 = vsel %vm249, 1.0, 0.0
    %v266 = vsel %vm250, 1.0, 0.0
    %v267 = vsel %vm251, 1.0, 0.0
    %v268 = vsel %vm252, 1.0, 0.0
    %v269 = vsel %vm253, 1.0, 0.0
    %v270 = vsel %vm254, 1.0, 0.0
    %v271 = vsel %vm255, 1.0, 0.0
    %v272 = vsel %vm256, 1.0, 0.0
    %v273 = vsel %vm257, 1.0, 0.0
    %v274 = vsel %vm258, 1.0, 0.0
    %v275 = vlaneseq
    %v276 = vshrl.u32 %v275, 7
    %v277 = vsub.s32 0, %v276
    %v278 = vrot.slane %v233, %v277
    %v279 = vlaneseq
    %v280 = vshrl.u32 %v279, 7
    %v281 = vsub.s32 1, %v280
    %v282 = vrot.slane %v233, %v281
    %vm283 = vcmp.eq.s32.totalorder %v223, %v278
    %vm284 = vcmp.eq.s32.totalorder %v223, %v282
    %vm285 = vcmp.eq.s32.totalorder %v224, %v278
    %vm286 = vcmp.eq.s32.totalorder %v224, %v282
    %vm287 = vcmp.eq.s32.totalorder %v225, %v278
    %vm288 = vcmp.eq.s32.totalorder %v225, %v282
    %vm289 = vcmp.eq.s32.totalorder %v226, %v278
    %vm290 = vcmp.eq.s32.totalorder %v226, %v282
    %vm291 = vcmp.eq.s32.totalorder %v227, %v278
    %vm292 = vcmp.eq.s32.totalorder %v227, %v282
    %vm293 = vcmp.eq.s32.totalorder %v228, %v278
    %vm294 = vcmp.eq.s32.totalorder %v228, %v282
    %vm295 = vcmp.eq.s32.totalorder %v229, %v278
    %vm296 = vcmp.eq.s32.totalorder %v229, %v282
    %vm297 = vcmp.eq.s32.totalorder %v230, %v278
    %vm298 = vcmp.eq.s32.totalorder %v230, %v282
    %v300 = vlaneseq
    %v301 = vshrl.u32 %v300, 7
    %v302 = vsub.s32 0, %v301
    %v303 = vrot.slane %v234, %v302
    %v304 = vlaneseq
    %v305 = vshrl.u32 %v304, 7
    %v306 = vsub.s32 1, %v305
    %v307 = vrot.slane %v234, %v306
    %v310 = vsel %vm283, %v303, 0.0
    %v311 = vsel %vm284, %v307, 0.0
    %v312 = vsel %vm285, %v303, 0.0
    %v313 = vsel %vm286, %v307, 0.0
    %v314 = vsel %vm287, %v303, 0.0
    %v315 = vsel %vm288, %v307, 0.0
    %v316 = vsel %vm289, %v303, 0.0
    %v317 = vsel %vm290, %v307, 0.0
    %v318 = vsel %vm291, %v303, 0.0
    %v319 = vsel %vm292, %v307, 0.0
    %v320 = vsel %vm293, %v303, 0.0
    %v321 = vsel %vm294, %v307, 0.0
    %v322 = vsel %vm295, %v303, 0.0
    %v323 = vsel %vm296, %v307, 0.0
    %v324 = vsel %vm297, %v303, 0.0
    %v325 = vsel %vm298, %v307, 0.0
    %326 = vmatprep.subr.mxu0 0.0
    %327 = vmatpush1.xpose.msra.mxu0 0.0
    %328 = vmatprep.subr.mxu0 0.0
    %329 = vmatpush1.xpose.msra.mxu0 0.0
    %330 = vmatprep.subr.mxu0 0.0
    %331 = vmatpush1.xpose.msra.mxu0 0.0
    %332 = vmatprep.subr.mxu0 0.0
    %333 = vmatpush1.xpose.msra.mxu0 0.0
    %334 = vmatprep.subr.mxu0 0.0
    %335 = vmatpush1.xpose.msra.mxu0 0.0
    %336 = vmatprep.subr.mxu0 0.0
    %337 = vmatpush1.xpose.msra.mxu0 0.0
    %338 = vmatprep.subr.mxu0 0.0
    %339 = vmatpush1.xpose.msra.mxu0 0.0
    %340 = vmatprep.subr.mxu0 0.0
    %341 = vmatpush1.xpose.msra.mxu0 0.0
    %342 = vmatprep.subr.mxu0 %v274
    %343 = vmatpush1.xpose.msra.mxu0 %v273
    %344 = vmatprep.subr.mxu0 %v272
    %345 = vmatpush1.xpose.msra.mxu0 %v271
    %346 = vmatprep.subr.mxu0 %v270
    %347 = vmatpush1.xpose.msra.mxu0 %v269
    %348 = vmatprep.subr.mxu0 %v268
    %349 = vmatpush1.xpose.msra.mxu0 %v267
    %350 = vmatprep.subr.mxu0 %v266
    %351 = vmatpush1.xpose.msra.mxu0 %v265
    %352 = vmatprep.subr.mxu0 %v264
    %353 = vmatpush1.xpose.msra.mxu0 %v263
    %354 = vmatprep.subr.mxu0 %v262
    %355 = vmatpush1.xpose.msra.mxu0 %v261
    %356 = vmatprep.subr.mxu0 %v260
    %357 = vmatpush1.xpose.msra.mxu0 %v259
    %358 = vmatprep.subr.mxu0 0.0
    %359 = vmatpush2.xpose.msra.mxu0 0.0
    %360 = vmatprep.subr.mxu0 0.0
    %361 = vmatpush2.xpose.msra.mxu0 0.0
    %362 = vmatprep.subr.mxu0 0.0
    %363 = vmatpush2.xpose.msra.mxu0 0.0
    %364 = vmatprep.subr.mxu0 0.0
    %365 = vmatpush2.xpose.msra.mxu0 0.0
    %366 = vmatprep.subr.mxu0 0.0
    %367 = vmatpush2.xpose.msra.mxu0 0.0
    %368 = vmatprep.subr.mxu0 0.0
    %369 = vmatpush2.xpose.msra.mxu0 0.0
    %370 = vmatprep.subr.mxu0 0.0
    %371 = vmatpush2.xpose.msra.mxu0 0.0
    %372 = vmatprep.subr.mxu0 0.0
    %373 = vmatpush2.xpose.msra.mxu0 0.0
    %374 = vmatprep.subr.mxu0 0.0
    %375 = vmatpush2.xpose.msra.mxu0 0.0
    %376 = vmatprep.subr.mxu0 0.0
    %377 = vmatpush2.xpose.msra.mxu0 0.0
    %378 = vmatprep.subr.mxu0 0.0
    %379 = vmatpush2.xpose.msra.mxu0 0.0
    %380 = vmatprep.subr.mxu0 0.0
    %381 = vmatpush2.xpose.msra.mxu0 0.0
    %382 = vmatprep.subr.mxu0 0.0
    %383 = vmatpush2.xpose.msra.mxu0 0.0
    %384 = vmatprep.subr.mxu0 0.0
    %385 = vmatpush2.xpose.msra.mxu0 0.0
    %386 = vmatprep.subr.mxu0 0.0
    %387 = vmatpush2.xpose.msra.mxu0 0.0
    %388 = vmatprep.subr.mxu0 0.0
    %389 = vmatpush2.xpose.msra.mxu0 0.0
    %390 = vmatprep.mubr.f32.mxu0 %v311
    %391 = vmatmul.mubr.f32.gmra.mxu0 %v310
    %v392 = vpop.f32.mrf.mxu0
    %v393 = vadd.f32 0.0, %v392
    %v394 = vpop.f32.mrf.mxu0
    %395 = vmatprep.mubr.f32.mxu0 %v313
    %396 = vmatmul.mubr.f32.gmra.mxu0 %v312
    %v397 = vpop.f32.mrf.mxu0
    %v398 = vadd.f32 0.0, %v397
    %v399 = vpop.f32.mrf.mxu0
    %400 = vmatprep.mubr.f32.mxu0 %v315
    %401 = vmatmul.mubr.f32.gmra.mxu0 %v314
    %v402 = vpop.f32.mrf.mxu0
    %v403 = vadd.f32 0.0, %v402
    %v404 = vpop.f32.mrf.mxu0
    %405 = vmatprep.mubr.f32.mxu0 %v317
    %406 = vmatmul.mubr.f32.gmra.mxu0 %v316
    %v407 = vpop.f32.mrf.mxu0
    %v408 = vadd.f32 0.0, %v407
    %v409 = vpop.f32.mrf.mxu0
    %410 = vmatprep.mubr.f32.mxu0 %v319
    %411 = vmatmul.mubr.f32.gmra.mxu0 %v318
    %v412 = vpop.f32.mrf.mxu0
    %v413 = vadd.f32 0.0, %v412
    %v414 = vpop.f32.mrf.mxu0
    %415 = vmatprep.mubr.f32.mxu0 %v321
    %416 = vmatmul.mubr.f32.gmra.mxu0 %v320
    %v417 = vpop.f32.mrf.mxu0
    %v418 = vadd.f32 0.0, %v417
    %v419 = vpop.f32.mrf.mxu0
    %420 = vmatprep.mubr.f32.mxu0 %v323
    %421 = vmatmul.mubr.f32.gmra.mxu0 %v322
    %v422 = vpop.f32.mrf.mxu0
    %v423 = vadd.f32 0.0, %v422
    %v424 = vpop.f32.mrf.mxu0
    %425 = vmatprep.mubr.f32.mxu0 %v325
    %426 = vmatmul.mubr.f32.gmra.mxu0 %v324
    %v427 = vpop.f32.mrf.mxu0
    %v428 = vadd.f32 0.0, %v427
    %v429 = vpop.f32.mrf.mxu0
    %430 = vdwg.mxu0
    %vm431 = vcmask 523264
    %v433 = vsel %vm431, %v393, 0
    %v436 = vsel %vm431, %v398, 0
    %v439 = vsel %vm431, %v403, 0
    %v442 = vsel %vm431, %v408, 0
    %v445 = vsel %vm431, %v413, 0
    %v448 = vsel %vm431, %v418, 0
    %v451 = vsel %vm431, %v423, 0
    %v454 = vsel %vm431, %v428, 0
    %456 = vmatprep.subr.mxu0 0.0
    %457 = vmatpush1.msra.mxu0 0.0
    %458 = vmatprep.subr.mxu0 0.0
    %459 = vmatpush1.msra.mxu0 0.0
    %460 = vmatprep.subr.mxu0 0.0
    %461 = vmatpush1.msra.mxu0 0.0
    %462 = vmatprep.subr.mxu0 0.0
    %463 = vmatpush1.msra.mxu0 0.0
    %464 = vmatprep.subr.mxu0 0.0
    %465 = vmatpush1.msra.mxu0 0.0
    %466 = vmatprep.subr.mxu0 0.0
    %467 = vmatpush1.msra.mxu0 0.0
    %468 = vmatprep.subr.mxu0 0.0
    %469 = vmatpush1.msra.mxu0 0.0
    %470 = vmatprep.subr.mxu0 0.0
    %471 = vmatpush1.msra.mxu0 0.0
    %472 = vmatprep.subr.mxu0 0.0
    %473 = vmatpush1.msra.mxu0 %v189
    %474 = vmatprep.subr.mxu0 0.0
    %475 = vmatpush1.msra.mxu0 %v188
    %476 = vmatprep.subr.mxu0 0.0
    %477 = vmatpush1.msra.mxu0 %v187
    %478 = vmatprep.subr.mxu0 0.0
    %479 = vmatpush1.msra.mxu0 %v186
    %480 = vmatprep.subr.mxu0 0.0
    %481 = vmatpush1.msra.mxu0 %v185
    %482 = vmatprep.subr.mxu0 0.0
    %483 = vmatpush1.msra.mxu0 %v184
    %484 = vmatprep.subr.mxu0 0.0
    %485 = vmatpush1.msra.mxu0 %v183
    %486 = vmatprep.subr.mxu0 0.0
    %487 = vmatpush1.msra.mxu0 %v182
    %488 = vmatprep.subr.mxu0 0.0
    %489 = vmatpush2.msra.mxu0 0.0
    %490 = vmatprep.subr.mxu0 0.0
    %491 = vmatpush2.msra.mxu0 0.0
    %492 = vmatprep.subr.mxu0 0.0
    %493 = vmatpush2.msra.mxu0 0.0
    %494 = vmatprep.subr.mxu0 0.0
    %495 = vmatpush2.msra.mxu0 0.0
    %496 = vmatprep.subr.mxu0 0.0
    %497 = vmatpush2.msra.mxu0 0.0
    %498 = vmatprep.subr.mxu0 0.0
    %499 = vmatpush2.msra.mxu0 0.0
    %500 = vmatprep.subr.mxu0 0.0
    %501 = vmatpush2.msra.mxu0 0.0
    %502 = vmatprep.subr.mxu0 0.0
    %503 = vmatpush2.msra.mxu0 0.0
    %504 = vmatprep.subr.mxu0 0.0
    %505 = vmatpush2.msra.mxu0 0.0
    %506 = vmatprep.subr.mxu0 0.0
    %507 = vmatpush2.msra.mxu0 0.0
    %508 = vmatprep.subr.mxu0 0.0
    %509 = vmatpush2.msra.mxu0 0.0
    %510 = vmatprep.subr.mxu0 0.0
    %511 = vmatpush2.msra.mxu0 0.0
    %512 = vmatprep.subr.mxu0 0.0
    %513 = vmatpush2.msra.mxu0 0.0
    %514 = vmatprep.subr.mxu0 0.0
    %515 = vmatpush2.msra.mxu0 0.0
    %516 = vmatprep.subr.mxu0 0.0
    %517 = vmatpush2.msra.mxu0 0.0
    %518 = vmatprep.subr.mxu0 0.0
    %519 = vmatpush2.msra.mxu0 0.0
    %520 = vmatprep.mubr.f32.mxu0 0.0
    %521 = vmatmul.mubr.f32.gmra.mxu0 %v433
    %v522 = vpop.f32.mrf.mxu0
    %v523 = vadd.f32 0.0, %v522
    %v524 = vpop.f32.mrf.mxu0
    %525 = vmatprep.mubr.f32.mxu0 0.0
    %526 = vmatmul.mubr.f32.gmra.mxu0 %v436
    %v527 = vpop.f32.mrf.mxu0
    %v528 = vadd.f32 0.0, %v527
    %v529 = vpop.f32.mrf.mxu0
    %530 = vmatprep.mubr.f32.mxu0 0.0
    %531 = vmatmul.mubr.f32.gmra.mxu0 %v439
    %v532 = vpop.f32.mrf.mxu0
    %v533 = vadd.f32 0.0, %v532
    %v534 = vpop.f32.mrf.mxu0
    %535 = vmatprep.mubr.f32.mxu0 0.0
    %536 = vmatmul.mubr.f32.gmra.mxu0 %v442
    %v537 = vpop.f32.mrf.mxu0
    %v538 = vadd.f32 0.0, %v537
    %v539 = vpop.f32.mrf.mxu0
    %540 = vmatprep.mubr.f32.mxu0 0.0
    %541 = vmatmul.mubr.f32.gmra.mxu0 %v445
    %v542 = vpop.f32.mrf.mxu0
    %v543 = vadd.f32 0.0, %v542
    %v544 = vpop.f32.mrf.mxu0
    %545 = vmatprep.mubr.f32.mxu0 0.0
    %546 = vmatmul.mubr.f32.gmra.mxu0 %v448
    %v547 = vpop.f32.mrf.mxu0
    %v548 = vadd.f32 0.0, %v547
    %v549 = vpop.f32.mrf.mxu0
    %550 = vmatprep.mubr.f32.mxu0 0.0
    %551 = vmatmul.mubr.f32.gmra.mxu0 %v451
    %v552 = vpop.f32.mrf.mxu0
    %v553 = vadd.f32 0.0, %v552
    %v554 = vpop.f32.mrf.mxu0
    %555 = vmatprep.mubr.f32.mxu0 0.0
    %556 = vmatmul.mubr.f32.gmra.mxu0 %v454
    %v557 = vpop.f32.mrf.mxu0
    %v558 = vadd.f32 0.0, %v557
    %v559 = vpop.f32.mrf.mxu0
    %560 = vdwg.mxu0
    %561 = vmatprep.subr.mxu0 0.0
    %562 = vmatpush1.msra.mxu0 0.0
    %563 = vmatprep.subr.mxu0 0.0
    %564 = vmatpush1.msra.mxu0 0.0
    %565 = vmatprep.subr.mxu0 0.0
    %566 = vmatpush1.msra.mxu0 0.0
    %567 = vmatprep.subr.mxu0 0.0
    %568 = vmatpush1.msra.mxu0 0.0
    %569 = vmatprep.subr.mxu0 0.0
    %570 = vmatpush1.msra.mxu0 0.0
    %571 = vmatprep.subr.mxu0 0.0
    %572 = vmatpush1.msra.mxu0 0.0
    %573 = vmatprep.subr.mxu0 0.0
    %574 = vmatpush1.msra.mxu0 0.0
    %575 = vmatprep.subr.mxu0 0.0
    %576 = vmatpush1.msra.mxu0 0.0
    %577 = vmatprep.subr.mxu0 0.0
    %578 = vmatpush1.msra.mxu0 %v558
    %579 = vmatprep.subr.mxu0 0.0
    %580 = vmatpush1.msra.mxu0 %v553
    %581 = vmatprep.subr.mxu0 0.0
    %582 = vmatpush1.msra.mxu0 %v548
    %583 = vmatprep.subr.mxu0 0.0
    %584 = vmatpush1.msra.mxu0 %v543
    %585 = vmatprep.subr.mxu0 0.0
    %586 = vmatpush1.msra.mxu0 %v538
    %587 = vmatprep.subr.mxu0 0.0
    %588 = vmatpush1.msra.mxu0 %v533
    %589 = vmatprep.subr.mxu0 0.0
    %590 = vmatpush1.msra.mxu0 %v528
    %591 = vmatprep.subr.mxu0 0.0
    %592 = vmatpush1.msra.mxu0 %v523
    %593 = vmatprep.subr.mxu0 0.0
    %594 = vmatpush2.msra.mxu0 0.0
    %595 = vmatprep.subr.mxu0 0.0
    %596 = vmatpush2.msra.mxu0 0.0
    %597 = vmatprep.subr.mxu0 0.0
    %598 = vmatpush2.msra.mxu0 0.0
    %599 = vmatprep.subr.mxu0 0.0
    %600 = vmatpush2.msra.mxu0 0.0
    %601 = vmatprep.subr.mxu0 0.0
    %602 = vmatpush2.msra.mxu0 0.0
    %603 = vmatprep.subr.mxu0 0.0
    %604 = vmatpush2.msra.mxu0 0.0
    %605 = vmatprep.subr.mxu0 0.0
    %606 = vmatpush2.msra.mxu0 0.0
    %607 = vmatprep.subr.mxu0 0.0
    %608 = vmatpush2.msra.mxu0 0.0
    %609 = vmatprep.subr.mxu0 0.0
    %610 = vmatpush2.msra.mxu0 0.0
    %611 = vmatprep.subr.mxu0 0.0
    %612 = vmatpush2.msra.mxu0 0.0
    %613 = vmatprep.subr.mxu0 0.0
    %614 = vmatpush2.msra.mxu0 0.0
    %615 = vmatprep.subr.mxu0 0.0
    %616 = vmatpush2.msra.mxu0 0.0
    %617 = vmatprep.subr.mxu0 0.0
    %618 = vmatpush2.msra.mxu0 0.0
    %619 = vmatprep.subr.mxu0 0.0
    %620 = vmatpush2.msra.mxu0 0.0
    %621 = vmatprep.subr.mxu0 0.0
    %622 = vmatpush2.msra.mxu0 0.0
    %623 = vmatprep.subr.mxu0 0.0
    %624 = vmatpush2.msra.mxu0 0.0
    %625 = vmatprep.mubr.f32.mxu0 0.0
    %626 = vmatmul.mubr.f32.gmra.mxu0 %v433
    %v627 = vpop.f32.mrf.mxu0
    %v628 = vadd.f32 0.0, %v627
    %v629 = vpop.f32.mrf.mxu0
    %630 = vmatprep.mubr.f32.mxu0 0.0
    %631 = vmatmul.mubr.f32.gmra.mxu0 %v436
    %v632 = vpop.f32.mrf.mxu0
    %v633 = vadd.f32 0.0, %v632
    %v634 = vpop.f32.mrf.mxu0
    %635 = vmatprep.mubr.f32.mxu0 0.0
    %636 = vmatmul.mubr.f32.gmra.mxu0 %v439
    %v637 = vpop.f32.mrf.mxu0
    %v638 = vadd.f32 0.0, %v637
    %v639 = vpop.f32.mrf.mxu0
    %640 = vmatprep.mubr.f32.mxu0 0.0
    %641 = vmatmul.mubr.f32.gmra.mxu0 %v442
    %v642 = vpop.f32.mrf.mxu0
    %v643 = vadd.f32 0.0, %v642
    %v644 = vpop.f32.mrf.mxu0
    %645 = vmatprep.mubr.f32.mxu0 0.0
    %646 = vmatmul.mubr.f32.gmra.mxu0 %v445
    %v647 = vpop.f32.mrf.mxu0
    %v648 = vadd.f32 0.0, %v647
    %v649 = vpop.f32.mrf.mxu0
    %650 = vmatprep.mubr.f32.mxu0 0.0
    %651 = vmatmul.mubr.f32.gmra.mxu0 %v448
    %v652 = vpop.f32.mrf.mxu0
    %v653 = vadd.f32 0.0, %v652
    %v654 = vpop.f32.mrf.mxu0
    %655 = vmatprep.mubr.f32.mxu0 0.0
    %656 = vmatmul.mubr.f32.gmra.mxu0 %v451
    %v657 = vpop.f32.mrf.mxu0
    %v658 = vadd.f32 0.0, %v657
    %v659 = vpop.f32.mrf.mxu0
    %660 = vmatprep.mubr.f32.mxu0 0.0
    %661 = vmatmul.mubr.f32.gmra.mxu0 %v454
    %v662 = vpop.f32.mrf.mxu0
    %v663 = vadd.f32 0.0, %v662
    %v664 = vpop.f32.mrf.mxu0
    %665 = vdwg.mxu0
    %674 = vrot.lane.b32.xlu0 %v523, 32
    %v675 = vpop.permute.xlu0 %674
    %676 = vrot.lane.b32.xlu0 %v528, 32
    %v677 = vpop.permute.xlu0 %676
    %678 = vrot.lane.b32.xlu0 %v533, 32
    %v679 = vpop.permute.xlu0 %678
    %680 = vrot.lane.b32.xlu0 %v538, 32
    %v681 = vpop.permute.xlu0 %680
    %682 = vrot.lane.b32.xlu0 %v543, 32
    %v683 = vpop.permute.xlu0 %682
    %684 = vrot.lane.b32.xlu0 %v548, 32
    %v685 = vpop.permute.xlu0 %684
    %686 = vrot.lane.b32.xlu0 %v553, 32
    %v687 = vpop.permute.xlu0 %686
    %688 = vrot.lane.b32.xlu0 %v558, 32
    %v689 = vpop.permute.xlu0 %688
    %706 = vrot.lane.b32.xlu0 %v628, 64
    %v707 = vpop.permute.xlu0 %706
    %708 = vrot.lane.b32.xlu0 %v633, 64
    %v709 = vpop.permute.xlu0 %708
    %710 = vrot.lane.b32.xlu0 %v638, 64
    %v711 = vpop.permute.xlu0 %710
    %712 = vrot.lane.b32.xlu0 %v643, 64
    %v713 = vpop.permute.xlu0 %712
    %714 = vrot.lane.b32.xlu0 %v648, 64
    %v715 = vpop.permute.xlu0 %714
    %716 = vrot.lane.b32.xlu0 %v653, 64
    %v717 = vpop.permute.xlu0 %716
    %718 = vrot.lane.b32.xlu0 %v658, 64
    %v719 = vpop.permute.xlu0 %718
    %720 = vrot.lane.b32.xlu0 %v663, 64
    %v721 = vpop.permute.xlu0 %720
    %v730 = vsel %vm43, %v182, %v675
    %v731 = vsel %vm43, %v183, %v677
    %v732 = vsel %vm43, %v184, %v679
    %v733 = vsel %vm43, %v185, %v681
    %v734 = vsel %vm43, %v186, %v683
    %v735 = vsel %vm43, %v187, %v685
    %v736 = vsel %vm43, %v188, %v687
    %v737 = vsel %vm43, %v189, %v689
    %v738 = vsel %vm431, %v730, %v707
    %v739 = vsel %vm431, %v731, %v709
    %v740 = vsel %vm431, %v732, %v711
    %v741 = vsel %vm431, %v733, %v713
    %v742 = vsel %vm431, %v734, %v715
    %v743 = vsel %vm431, %v735, %v717
    %v744 = vsel %vm431, %v736, %v719
    %v745 = vsel %vm431, %v737, %v721
    %v746 = vlaneseq
    %v747 = vshrl.u32 %v746, 7
    %v748 = vsub.s32 0, %v747
    %v749 = vrot.slane %v42, %v748
    %vm750 = vcmask 785408
    %v752 = vsel %vm750, %v738, 0
    %v755 = vsel %vm750, %v739, 0
    %v758 = vsel %vm750, %v740, 0
    %v761 = vsel %vm750, %v741, 0
    %v764 = vsel %vm750, %v742, 0
    %v767 = vsel %vm750, %v743, 0
    %v770 = vsel %vm750, %v744, 0
    %v773 = vsel %vm750, %v745, 0
    %775 = vmatprep.subr.mxu0 0.0
    %776 = vmatpush1.msra.mxu0 0.0
    %777 = vmatprep.subr.mxu0 0.0
    %778 = vmatpush1.msra.mxu0 0.0
    %779 = vmatprep.subr.mxu0 0.0
    %780 = vmatpush1.msra.mxu0 0.0
    %781 = vmatprep.subr.mxu0 0.0
    %782 = vmatpush1.msra.mxu0 0.0
    %783 = vmatprep.subr.mxu0 0.0
    %784 = vmatpush1.msra.mxu0 %v39
    %785 = vmatprep.subr.mxu0 0.0
    %786 = vmatpush1.msra.mxu0 %v38
    %787 = vmatprep.subr.mxu0 0.0
    %788 = vmatpush1.msra.mxu0 %v37
    %789 = vmatprep.subr.mxu0 0.0
    %790 = vmatpush1.msra.mxu0 %v36
    %791 = vmatprep.subr.mxu0 0.0
    %792 = vmatpush1.msra.mxu0 %v35
    %793 = vmatprep.subr.mxu0 0.0
    %794 = vmatpush1.msra.mxu0 %v34
    %795 = vmatprep.subr.mxu0 0.0
    %796 = vmatpush1.msra.mxu0 %v33
    %797 = vmatprep.subr.mxu0 0.0
    %798 = vmatpush1.msra.mxu0 %v32
    %799 = vmatprep.subr.mxu0 0.0
    %800 = vmatpush1.msra.mxu0 %v31
    %801 = vmatprep.subr.mxu0 0.0
    %802 = vmatpush1.msra.mxu0 %v30
    %803 = vmatprep.subr.mxu0 0.0
    %804 = vmatpush1.msra.mxu0 %v29
    %805 = vmatprep.subr.mxu0 0.0
    %806 = vmatpush1.msra.mxu0 %v28
    %807 = vmatprep.subr.mxu0 0.0
    %808 = vmatpush2.msra.mxu0 0.0
    %809 = vmatprep.subr.mxu0 0.0
    %810 = vmatpush2.msra.mxu0 0.0
    %811 = vmatprep.subr.mxu0 0.0
    %812 = vmatpush2.msra.mxu0 0.0
    %813 = vmatprep.subr.mxu0 0.0
    %814 = vmatpush2.msra.mxu0 0.0
    %815 = vmatprep.subr.mxu0 0.0
    %816 = vmatpush2.msra.mxu0 0.0
    %817 = vmatprep.subr.mxu0 0.0
    %818 = vmatpush2.msra.mxu0 0.0
    %819 = vmatprep.subr.mxu0 0.0
    %820 = vmatpush2.msra.mxu0 0.0
    %821 = vmatprep.subr.mxu0 0.0
    %822 = vmatpush2.msra.mxu0 0.0
    %823 = vmatprep.subr.mxu0 0.0
    %824 = vmatpush2.msra.mxu0 0.0
    %825 = vmatprep.subr.mxu0 0.0
    %826 = vmatpush2.msra.mxu0 0.0
    %827 = vmatprep.subr.mxu0 0.0
    %828 = vmatpush2.msra.mxu0 0.0
    %829 = vmatprep.subr.mxu0 0.0
    %830 = vmatpush2.msra.mxu0 0.0
    %831 = vmatprep.subr.mxu0 0.0
    %832 = vmatpush2.msra.mxu0 0.0
    %833 = vmatprep.subr.mxu0 0.0
    %834 = vmatpush2.msra.mxu0 0.0
    %835 = vmatprep.subr.mxu0 0.0
    %836 = vmatpush2.msra.mxu0 0.0
    %837 = vmatprep.subr.mxu0 0.0
    %838 = vmatpush2.msra.mxu0 0.0
    %839 = vmatprep.mubr.f32.mxu0 0.0
    %840 = vmatmul.mubr.f32.gmra.mxu0 %v752
    %v841 = vpop.f32.mrf.mxu0
    %v842 = vadd.f32 %v749, %v841
    %v843 = vpop.f32.mrf.mxu0
    %844 = vmatprep.mubr.f32.mxu0 0.0
    %845 = vmatmul.mubr.f32.gmra.mxu0 %v755
    %v846 = vpop.f32.mrf.mxu0
    %v847 = vadd.f32 %v749, %v846
    %v848 = vpop.f32.mrf.mxu0
    %849 = vmatprep.mubr.f32.mxu0 0.0
    %850 = vmatmul.mubr.f32.gmra.mxu0 %v758
    %v851 = vpop.f32.mrf.mxu0
    %v852 = vadd.f32 %v749, %v851
    %v853 = vpop.f32.mrf.mxu0
    %854 = vmatprep.mubr.f32.mxu0 0.0
    %855 = vmatmul.mubr.f32.gmra.mxu0 %v761
    %v856 = vpop.f32.mrf.mxu0
    %v857 = vadd.f32 %v749, %v856
    %v858 = vpop.f32.mrf.mxu0
    %859 = vmatprep.mubr.f32.mxu0 0.0
    %860 = vmatmul.mubr.f32.gmra.mxu0 %v764
    %v861 = vpop.f32.mrf.mxu0
    %v862 = vadd.f32 %v749, %v861
    %v863 = vpop.f32.mrf.mxu0
    %864 = vmatprep.mubr.f32.mxu0 0.0
    %865 = vmatmul.mubr.f32.gmra.mxu0 %v767
    %v866 = vpop.f32.mrf.mxu0
    %v867 = vadd.f32 %v749, %v866
    %v868 = vpop.f32.mrf.mxu0
    %869 = vmatprep.mubr.f32.mxu0 0.0
    %870 = vmatmul.mubr.f32.gmra.mxu0 %v770
    %v871 = vpop.f32.mrf.mxu0
    %v872 = vadd.f32 %v749, %v871
    %v873 = vpop.f32.mrf.mxu0
    %874 = vmatprep.mubr.f32.mxu0 0.0
    %875 = vmatmul.mubr.f32.gmra.mxu0 %v773
    %v876 = vpop.f32.mrf.mxu0
    %v877 = vadd.f32 %v749, %v876
    %v878 = vpop.f32.mrf.mxu0
    %879 = vdwg.mxu0
    %v880 = vmul.f32 %v842, %v842
    %v881 = vmul.f32 %v847, %v847
    %v882 = vmul.f32 %v852, %v852
    %v883 = vmul.f32 %v857, %v857
    %v884 = vmul.f32 %v862, %v862
    %v885 = vmul.f32 %v867, %v867
    %v886 = vmul.f32 %v872, %v872
    %v887 = vmul.f32 %v877, %v877
    %v888 = vsel %vm43, %v880, 0.0
    %889 = vadd.xlane.f32.xlu0 %v888
    %v890 = vpop.xlane.xlu0 %889
    %v891 = vsel %vm43, %v881, 0.0
    %892 = vadd.xlane.f32.xlu0 %v891
    %v893 = vpop.xlane.xlu0 %892
    %v894 = vsel %vm43, %v882, 0.0
    %895 = vadd.xlane.f32.xlu0 %v894
    %v896 = vpop.xlane.xlu0 %895
    %v897 = vsel %vm43, %v883, 0.0
    %898 = vadd.xlane.f32.xlu0 %v897
    %v899 = vpop.xlane.xlu0 %898
    %v900 = vsel %vm43, %v884, 0.0
    %901 = vadd.xlane.f32.xlu0 %v900
    %v902 = vpop.xlane.xlu0 %901
    %v903 = vsel %vm43, %v885, 0.0
    %904 = vadd.xlane.f32.xlu0 %v903
    %v905 = vpop.xlane.xlu0 %904
    %v906 = vsel %vm43, %v886, 0.0
    %907 = vadd.xlane.f32.xlu0 %v906
    %v908 = vpop.xlane.xlu0 %907
    %v909 = vsel %vm43, %v887, 0.0
    %910 = vadd.xlane.f32.xlu0 %v909
    %v911 = vpop.xlane.xlu0 %910
    %v912 = vadd.f32 %v842, %v20
    %v913 = vadd.f32 %v847, %v21
    %v914 = vadd.f32 %v852, %v22
    %v915 = vadd.f32 %v857, %v23
    %v916 = vadd.f32 %v862, %v24
    %v917 = vadd.f32 %v867, %v25
    %v918 = vadd.f32 %v872, %v26
    %v919 = vadd.f32 %v877, %v27
    %v920 = vmul.f32 %v912, %v912
    %v921 = vmul.f32 %v913, %v913
    %v922 = vmul.f32 %v914, %v914
    %v923 = vmul.f32 %v915, %v915
    %v924 = vmul.f32 %v916, %v916
    %v925 = vmul.f32 %v917, %v917
    %v926 = vmul.f32 %v918, %v918
    %v927 = vmul.f32 %v919, %v919
    %v928 = vsel %vm43, %v920, 0.0
    %929 = vadd.xlane.f32.xlu0 %v928
    %v930 = vpop.xlane.xlu0 %929
    %v931 = vsel %vm43, %v921, 0.0
    %932 = vadd.xlane.f32.xlu0 %v931
    %v933 = vpop.xlane.xlu0 %932
    %v934 = vsel %vm43, %v922, 0.0
    %935 = vadd.xlane.f32.xlu0 %v934
    %v936 = vpop.xlane.xlu0 %935
    %v937 = vsel %vm43, %v923, 0.0
    %938 = vadd.xlane.f32.xlu0 %v937
    %v939 = vpop.xlane.xlu0 %938
    %v940 = vsel %vm43, %v924, 0.0
    %941 = vadd.xlane.f32.xlu0 %v940
    %v942 = vpop.xlane.xlu0 %941
    %v943 = vsel %vm43, %v925, 0.0
    %944 = vadd.xlane.f32.xlu0 %v943
    %v945 = vpop.xlane.xlu0 %944
    %v946 = vsel %vm43, %v926, 0.0
    %947 = vadd.xlane.f32.xlu0 %v946
    %v948 = vpop.xlane.xlu0 %947
    %v949 = vsel %vm43, %v927, 0.0
    %950 = vadd.xlane.f32.xlu0 %v949
    %v951 = vpop.xlane.xlu0 %950
    %952 = vst.msk [vmem:[%s4] sm:$0xff] %vm43, %v912
    %953 = vst.msk [vmem:[%s4 + $0x8] sm:$0xff] %vm43, %v913
    %954 = vst.msk [vmem:[%s4 + $0x10] sm:$0xff] %vm43, %v914
    %955 = vst.msk [vmem:[%s4 + $0x18] sm:$0xff] %vm43, %v915
    %956 = vst.msk [vmem:[%s4 + $0x20] sm:$0xff] %vm43, %v916
    %957 = vst.msk [vmem:[%s4 + $0x28] sm:$0xff] %vm43, %v917
    %958 = vst.msk [vmem:[%s4 + $0x30] sm:$0xff] %vm43, %v918
    %959 = vst.msk [vmem:[%s4 + $0x38] sm:$0xff] %vm43, %v919
    %vm960 = vcmask 7168
    %v961 = vsel %vm960, %v144, %v200
    %v962 = vsel %vm960, %v147, %v203
    %v963 = vsel %vm960, %v150, %v206
    %v964 = vsel %vm960, %v153, %v209
    %v965 = vsel %vm960, %v156, %v212
    %v966 = vsel %vm960, %v159, %v215
    %v967 = vsel %vm960, %v162, %v218
    %v968 = vsel %vm960, %v165, %v221
    %vm969 = vcmask 15360
    %v970 = vsel %vm969, %v961, %v890
    %v971 = vsel %vm969, %v962, %v893
    %v972 = vsel %vm969, %v963, %v896
    %v973 = vsel %vm969, %v964, %v899
    %v974 = vsel %vm969, %v965, %v902
    %v975 = vsel %vm969, %v966, %v905
    %v976 = vsel %vm969, %v967, %v908
    %v977 = vsel %vm969, %v968, %v911
    %vm978 = vcmask 23552
    %v979 = vsel %vm978, %v970, %v930
    %v980 = vsel %vm978, %v971, %v933
    %v981 = vsel %vm978, %v972, %v936
    %v982 = vsel %vm978, %v973, %v939
    %v983 = vsel %vm978, %v974, %v942
    %v984 = vsel %vm978, %v975, %v945
    %v985 = vsel %vm978, %v976, %v948
    %v986 = vsel %vm978, %v977, %v951
    %v987 = vrsqrt.pop %v979
    %v988 = vmul.f32 %v979, %v987
    %vm989 = vcmp.eq.f32.partialorder %v979, inf
    %v990 = vsel %vm989, %v979, %v988
    %vm991 = vcmp.eq.f32.partialorder %v979, 0.0
    %v992 = vand.u32 %v979, 2147483648
    %v993 = vsel %vm991, %v992, %v990
    %v994 = vrsqrt.pop %v980
    %v995 = vmul.f32 %v980, %v994
    %vm996 = vcmp.eq.f32.partialorder %v980, inf
    %v997 = vsel %vm996, %v980, %v995
    %vm998 = vcmp.eq.f32.partialorder %v980, 0.0
    %v999 = vand.u32 %v980, 2147483648
    %v1000 = vsel %vm998, %v999, %v997
    %v1001 = vrsqrt.pop %v981
    %v1002 = vmul.f32 %v981, %v1001
    %vm1003 = vcmp.eq.f32.partialorder %v981, inf
    %v1004 = vsel %vm1003, %v981, %v1002
    %vm1005 = vcmp.eq.f32.partialorder %v981, 0.0
    %v1006 = vand.u32 %v981, 2147483648
    %v1007 = vsel %vm1005, %v1006, %v1004
    %v1008 = vrsqrt.pop %v982
    %v1009 = vmul.f32 %v982, %v1008
    %vm1010 = vcmp.eq.f32.partialorder %v982, inf
    %v1011 = vsel %vm1010, %v982, %v1009
    %vm1012 = vcmp.eq.f32.partialorder %v982, 0.0
    %v1013 = vand.u32 %v982, 2147483648
    %v1014 = vsel %vm1012, %v1013, %v1011
    %v1015 = vrsqrt.pop %v983
    %v1016 = vmul.f32 %v983, %v1015
    %vm1017 = vcmp.eq.f32.partialorder %v983, inf
    %v1018 = vsel %vm1017, %v983, %v1016
    %vm1019 = vcmp.eq.f32.partialorder %v983, 0.0
    %v1020 = vand.u32 %v983, 2147483648
    %v1021 = vsel %vm1019, %v1020, %v1018
    %v1022 = vrsqrt.pop %v984
    %v1023 = vmul.f32 %v984, %v1022
    %vm1024 = vcmp.eq.f32.partialorder %v984, inf
    %v1025 = vsel %vm1024, %v984, %v1023
    %vm1026 = vcmp.eq.f32.partialorder %v984, 0.0
    %v1027 = vand.u32 %v984, 2147483648
    %v1028 = vsel %vm1026, %v1027, %v1025
    %v1029 = vrsqrt.pop %v985
    %v1030 = vmul.f32 %v985, %v1029
    %vm1031 = vcmp.eq.f32.partialorder %v985, inf
    %v1032 = vsel %vm1031, %v985, %v1030
    %vm1033 = vcmp.eq.f32.partialorder %v985, 0.0
    %v1034 = vand.u32 %v985, 2147483648
    %v1035 = vsel %vm1033, %v1034, %v1032
    %v1036 = vrsqrt.pop %v986
    %v1037 = vmul.f32 %v986, %v1036
    %vm1038 = vcmp.eq.f32.partialorder %v986, inf
    %v1039 = vsel %vm1038, %v986, %v1037
    %vm1040 = vcmp.eq.f32.partialorder %v986, 0.0
    %v1041 = vand.u32 %v986, 2147483648
    %v1042 = vsel %vm1040, %v1041, %v1039
    %vm1043 = vcmask 31744
    %v1044 = vsel %vm1043, %v993, 0.0
    %v1045 = vsel %vm1043, %v1000, 0.0
    %v1046 = vadd.f32 %v1044, %v1045
    %v1047 = vsel %vm1043, %v1007, 0.0
    %v1048 = vadd.f32 %v1046, %v1047
    %v1049 = vsel %vm1043, %v1014, 0.0
    %v1050 = vadd.f32 %v1048, %v1049
    %v1051 = vsel %vm1043, %v1021, 0.0
    %v1052 = vadd.f32 %v1050, %v1051
    %v1053 = vsel %vm1043, %v1028, 0.0
    %v1054 = vadd.f32 %v1052, %v1053
    %v1055 = vsel %vm1043, %v1035, 0.0
    %v1056 = vadd.f32 %v1054, %v1055
    %v1057 = vsel %vm1043, %v1042, 0.0
    %v1058 = vadd.f32 %v1056, %v1057
    %v1059 = vrot.slane %v1058, 4
    %v1060 = vadd.f32 %v1058, %v1059
    %v1061 = vrot.slane %v1060, 2
    %v1062 = vadd.f32 %v1060, %v1061
    %v1063 = vrot.slane %v1062, 1
    %v1064 = vadd.f32 %v1062, %v1063
    %v1065 = vmul.f32 %v1064, %v65
    %v1066 = vsub.f32 %v993, %v1065
    %v1067 = vsub.f32 %v1000, %v1065
    %v1068 = vsub.f32 %v1007, %v1065
    %v1069 = vsub.f32 %v1014, %v1065
    %v1070 = vsub.f32 %v1021, %v1065
    %v1071 = vsub.f32 %v1028, %v1065
    %v1072 = vsub.f32 %v1035, %v1065
    %v1073 = vsub.f32 %v1042, %v1065
    %v1074 = vmul.f32 %v1066, %v1066
    %v1075 = vmul.f32 %v1067, %v1067
    %v1076 = vmul.f32 %v1068, %v1068
    %v1077 = vmul.f32 %v1069, %v1069
    %v1078 = vmul.f32 %v1070, %v1070
    %v1079 = vmul.f32 %v1071, %v1071
    %v1080 = vmul.f32 %v1072, %v1072
    %v1081 = vmul.f32 %v1073, %v1073
    %v1082 = vsel %vm1043, %v1074, 0.0
    %v1083 = vsel %vm1043, %v1075, 0.0
    %v1084 = vadd.f32 %v1082, %v1083
    %v1085 = vsel %vm1043, %v1076, 0.0
    %v1086 = vadd.f32 %v1084, %v1085
    %v1087 = vsel %vm1043, %v1077, 0.0
    %v1088 = vadd.f32 %v1086, %v1087
    %v1089 = vsel %vm1043, %v1078, 0.0
    %v1090 = vadd.f32 %v1088, %v1089
    %v1091 = vsel %vm1043, %v1079, 0.0
    %v1092 = vadd.f32 %v1090, %v1091
    %v1093 = vsel %vm1043, %v1080, 0.0
    %v1094 = vadd.f32 %v1092, %v1093
    %v1095 = vsel %vm1043, %v1081, 0.0
    %v1096 = vadd.f32 %v1094, %v1095
    %v1097 = vrot.slane %v1096, 4
    %v1098 = vadd.f32 %v1096, %v1097
    %v1099 = vrot.slane %v1098, 2
    %v1100 = vadd.f32 %v1098, %v1099
    %v1101 = vrot.slane %v1100, 1
    %v1102 = vadd.f32 %v1100, %v1101
    %v1103 = vrcp.pop 63.0
    %v1104 = vmul.f32 %v1102, %v1103
    %vm1105 = vcmask 1040384
    %v1106 = vsel %vm1105, %v1065, %v1104
    %vm1107 = vcmask 25600
    %1108 = vst.msk [vmem:[#allocation2] sm:$0x3] %vm1107, %v1106
    // Predicated region
    $region18: #{_residual_layer_forward_jit.1} parent=1 // pred_check
      _
    $region19: #{_residual_layer_forward_jit.1} parent=1 // pred_check_branch
      %1110 = sbr.rel (0) target = $region21
    $region20: #{_residual_layer_forward_jit.1} parent=1 // pred_region
      _
    $region21: #{_residual_layer_forward_jit.1} parent=1 // pred_fallthru
      _
    // Predicated region
    $region22: #{_residual_layer_forward_jit.1} parent=1 // pred_check
      _
    $region23: #{_residual_layer_forward_jit.1} parent=1 // pred_check_branch
      %1112 = sbr.rel (0) target = $region25
    $region24: #{_residual_layer_forward_jit.1} parent=1 // pred_region
      %s1114 = ssub.s32 32, 32
      %1115 = vsyncadd [#allocation3], %s1114
      %s1117 = sshll.u32 [#allocation2], 4
      %s1118 = int_to_ptr.vmem [resolvable:$true] %s1117
      %1120 = dma.vmem_to_hbm [thread:$0]  %s1118, 32, %s5, [#allocation3]
    $region25: #{_residual_layer_forward_jit.1} parent=1 // pred_fallthru
      _
    // Predicated region
    $region26: #{_residual_layer_forward_jit.1} parent=1 // pred_check
      _
    $region27: #{_residual_layer_forward_jit.1} parent=1 // pred_check_branch
      %1122 = sbr.rel (0) target = $region29
    $region28: #{_residual_layer_forward_jit.1} parent=1 // pred_region
      _
    $region29: #{_residual_layer_forward_jit.1} parent=1 // pred_fallthru
      _
    // Predicated region
    $region30: #{_residual_layer_forward_jit.1} parent=1 // pred_check
      _
    $region31: #{_residual_layer_forward_jit.1} parent=1 // pred_check_branch
      %1124 = sbr.rel (0) target = $region33
    $region32: #{_residual_layer_forward_jit.1} parent=1 // pred_region
      %1125 = dma.done [#allocation3], 32
    $region33: #{_residual_layer_forward_jit.1} parent=1 // pred_fallthru
      _
    %1126 = vsyncpa [#allocation3], 1

</llo_original>
